<compile_context>
chip_gen: v7x
topology: tpu7x:2x2x1
jax: 0.10.0
libtpu: 0.0.40
codegen_flags: <defaults>
</compile_context>

<pallas_src>
import functools
import math

import jax
import jax.numpy as jnp
from jax import lax
from jax.experimental import pallas as pl
from jax.experimental.pallas import tpu as pltpu


def _round_up(x, a):
    return ((x + a - 1) // a) * a


# ---------------------------------------------------------------------------
# Pass 1: normalization + temperature fold + packing + positive-logit sum.
# ---------------------------------------------------------------------------
def _prep_kernel(zis_ref, zjs_ref, reps_ref, pos_ref, *,
                 n, m_pad, inv_sqrt_t, use_cosine):
    zis = zis_ref[...].astype(jnp.float32)          # (N, D)
    zjs = zjs_ref[...].astype(jnp.float32)          # (N, D)

    if use_cosine:
        def _normalize(x):
            ss = jnp.sum(x * x, axis=-1, keepdims=True)
            # equivalent to x / max(||x||, 1e-8)
            return x * lax.rsqrt(jnp.maximum(ss, jnp.float32(1e-16)))
        zis = _normalize(zis)
        zjs = _normalize(zjs)

    # Fold 1/sqrt(T) into every row so the similarity matmul directly produces
    # sim / T (no O(M^2) temperature divide anywhere).
    zis = zis * jnp.float32(inv_sqrt_t)
    zjs = zjs * jnp.float32(inv_sqrt_t)

    # torch.cat([zjs, zis], dim=0) layout plus zero rows up to the padded size.
    # TODO(synk): for very large N*D add a row-block grid here instead of the
    # single whole-array VMEM tile.
    reps_ref[0:n, :] = zjs.astype(reps_ref.dtype)
    reps_ref[n:2 * n, :] = zis.astype(reps_ref.dtype)
    if m_pad > 2 * n:
        reps_ref[2 * n:, :] = jnp.zeros(
            (m_pad - 2 * n, zis.shape[-1]), reps_ref.dtype)

    # Sum of the positive logits over all 2N rows.  Rows r and r+N share the
    # same positive value <zjs_r, zis_r>/T, hence the factor 2.  O(N*D) only.
    pos_ref[0, 0] = 2.0 * jnp.sum(zis * zjs)


# ---------------------------------------------------------------------------
# Pass 2: one full-width masked log-sum-exp strip per row block.
# ---------------------------------------------------------------------------
def _lse_strip_kernel(lhs_ref, rhs_ref, out_ref, *,
                      block, m_valid, n_pad, analytic_corrections):
    # (block, m_pad) logits strip on the MXU; inputs are already normalized
    # and pre-scaled by 1/sqrt(T); contraction on the feature axis of both
    # operands -> no rhs transpose.
    s = lax.dot_general(
        lhs_ref[...], rhs_ref[...],
        dimension_numbers=(((1,), (1,)), ((), ())),
        preferred_element_type=jnp.float32)

    if analytic_corrections:
        # Cosine path: leave diagonal / padded columns unmasked; remove their
        # (exactly known) contributions from l at finalize time. O(block) work.
        m = jnp.max(s, axis=-1, keepdims=True)
        l = jnp.sum(jnp.exp(s - m), axis=-1, keepdims=True)
        lhs = lhs_ref[...].astype(jnp.float32)
        self_logit = jnp.sum(lhs * lhs, axis=-1, keepdims=True)   # = <z_r, z_r>/T
        l = l - jnp.exp(self_logit - m)
        if n_pad > 0:
            # padded reps rows are exact zeros -> each padded column added exp(-m)
            l = l - jnp.float32(n_pad) * jnp.exp(-m)
    else:
        # Dot-product path: ||z||^2/T can dwarf every other logit, so mask it
        # (and the padded columns) before the max.  Masks stay in f32.
        col = lax.broadcasted_iota(jnp.int32, s.shape, 1)
        row = (lax.broadcasted_iota(jnp.int32, s.shape, 0)
               + pl.program_id(0) * block)
        mask = col == row
        if n_pad > 0:
            mask = jnp.logical_or(mask, col >= m_valid)
        s = jnp.where(mask, jnp.float32(-1e30), s)
        m = jnp.max(s, axis=-1, keepdims=True)
        l = jnp.sum(jnp.exp(s - m), axis=-1, keepdims=True)

    out_ref[...] = m + jnp.log(jnp.maximum(l, jnp.float32(1e-30)))


# ---------------------------------------------------------------------------
# Wrapper
# ---------------------------------------------------------------------------
def ntxent_loss(zis, zjs, *, temperature=0.5, use_cosine_similarity=True,
                block_size=None, matmul_dtype=jnp.bfloat16):
    n, d = zis.shape
    assert zjs.shape == (n, d)
    m = 2 * n

    if block_size is None:
        # >= 2 row strips so both v7x TensorCores get work; cap at 256 rows.
        block = min(256, _round_up(max(m // 2, 8), 8))
    else:
        block = int(block_size)
    assert block % 8 == 0
    m_pad = _round_up(m, block)
    nb = m_pad // block
    n_pad = m_pad - m

    inv_sqrt_t = 1.0 / math.sqrt(float(temperature))
    use_cosine = bool(use_cosine_similarity)

    # --- Pass 1: normalize + scale + pack [zjs; zis; 0] and positive-logit sum.
    reps, pos_sum = pl.pallas_call(
        functools.partial(_prep_kernel, n=n, m_pad=m_pad,
                          inv_sqrt_t=inv_sqrt_t, use_cosine=use_cosine),
        out_shape=(jax.ShapeDtypeStruct((m_pad, d), matmul_dtype),
                   jax.ShapeDtypeStruct((1, 1), jnp.float32)),
        in_specs=[pl.BlockSpec(memory_space=pltpu.VMEM),
                  pl.BlockSpec(memory_space=pltpu.VMEM)],
        out_specs=(pl.BlockSpec(memory_space=pltpu.VMEM),
                   pl.BlockSpec(memory_space=pltpu.SMEM)),
    )(zis, zjs)

    # --- Pass 2: full-width LSE strips; rhs resident via a constant index map.
    itemsize = jnp.dtype(matmul_dtype).itemsize
    vmem_bytes = (2 * m_pad * d * itemsize          # resident rhs (+ slack)
                  + 2 * block * d * itemsize        # double-buffered lhs strips
                  + 2 * block * 4                   # LSE output
                  + 4 * block * m_pad * 4)          # f32 logits-strip temporaries
    vmem_limit = int(min(max(2 * vmem_bytes, 16 * 1024 * 1024),
                         64 * 1024 * 1024))

    lse_rows = pl.pallas_call(
        functools.partial(_lse_strip_kernel, block=block, m_valid=m,
                          n_pad=n_pad, analytic_corrections=use_cosine),
        out_shape=jax.ShapeDtypeStruct((m_pad, 1), jnp.float32),
        grid_spec=pltpu.PrefetchScalarGridSpec(
            num_scalar_prefetch=0,
            grid=(nb,),
            in_specs=[pl.BlockSpec((block, d), lambda i: (i, 0)),   # row strip
                      pl.BlockSpec((m_pad, d), lambda i: (0, 0))],  # resident rhs
            out_specs=pl.BlockSpec((block, 1), lambda i: (i, 0))),
        compiler_params=pltpu.CompilerParams(
            dimension_semantics=("parallel",),
            vmem_limit_bytes=vmem_limit),
    )(reps, reps)

    total_lse = jnp.sum(lse_rows[:m, 0])
    return (total_lse - pos_sum[0, 0]) / m


# ---------------------------------------------------------------------------
# Pure-JAX reference (mirrors the PyTorch forward exactly).
# ---------------------------------------------------------------------------
def _ntxent_reference(zis, zjs, temperature, use_cosine):
    n = zis.shape[0]
    reps = jnp.concatenate([zjs, zis], axis=0).astype(jnp.float32)
    if use_cosine:
        reps = reps / jnp.maximum(
            jnp.linalg.norm(reps, axis=-1, keepdims=True), 1e-8)
    sim = jnp.matmul(reps, reps.T, precision=lax.Precision.HIGHEST)
    m = 2 * n
    l_pos = jnp.diagonal(sim, offset=n)
    r_pos = jnp.diagonal(sim, offset=-n)
    positives = jnp.concatenate([l_pos, r_pos]).reshape(m, 1)
    mask = ~(jnp.eye(m, dtype=bool)
             | jnp.eye(m, k=n, dtype=bool)
             | jnp.eye(m, k=-n, dtype=bool))
    negatives = sim[mask].reshape(m, m - 2)
    logits = jnp.concatenate([positives, negatives], axis=1) / temperature
    logprobs = jax.nn.log_softmax(logits, axis=-1)
    return -jnp.sum(logprobs[:, 0]) / m


if __name__ == "__main__":
    key = jax.random.PRNGKey(0)

    # (batch, dim, temperature, use_cosine, block, matmul_dtype, atol, rtol)
    cases = [
        (16, 32, 0.5, True, None, jnp.float32, 2e-3, 2e-3),    # small, 2 strips
        (16, 32, 0.5, True, None, jnp.bfloat16, 5e-2, 5e-2),
        (16, 32, 0.5, False, None, jnp.float32, 5e-3, 5e-3),   # dot path (iota mask)
        (112, 64, 0.5, True, 128, jnp.float32, 2e-3, 2e-3),    # 2 strips + 32 padded cols
        (112, 64, 0.5, True, 128, jnp.bfloat16, 5e-2, 5e-2),
        (112, 64, 0.5, False, 128, jnp.float32, 5e-2, 1e-2),   # dot path + padding
        (128, 64, 0.5, True, None, jnp.bfloat16, 5e-2, 5e-2),  # default block, no pad
    ]

    for idx, (batch, dim, temp, use_cos, block, mm_dtype, atol, rtol) in enumerate(cases):
        k1, k2 = jax.random.split(jax.random.fold_in(key, idx))
        zis = jax.random.normal(k1, (batch, dim), dtype=jnp.float32)
        zjs = jax.random.normal(k2, (batch, dim), dtype=jnp.float32)

        loss = ntxent_loss(zis, zjs, temperature=temp,
                           use_cosine_similarity=use_cos,
                           block_size=block, matmul_dtype=mm_dtype)
        loss = jax.block_until_ready(loss)

        ref = _ntxent_reference(zis, zjs, temp, use_cos)
        assert jnp.allclose(loss, ref, atol=atol, rtol=rtol), \
            (idx, float(loss), float(ref))

    print("KERNEL_OK")
</pallas_src>

<mosaic_0001>
module attributes {stable_mosaic.version = 11 : i64} {
  func.func @_prep_kernel(%arg0: memref<16x32xf32, #tpu.memory_space<vmem>>, %arg1: memref<16x32xf32, #tpu.memory_space<vmem>>, %arg2: memref<32x32xf32, #tpu.memory_space<vmem>>, %arg3: memref<1x1xf32, #tpu.memory_space<smem>>) attributes {dimension_semantics = [], scalar_prefetch = 0 : i64, scratch_operands = 0 : i64, tpu.core_type = #tpu.core_type<tc>} {
    %c0 = arith.constant 0 : index
    %c0_0 = arith.constant 0 : index
    %0 = vector.load %arg0[%c0, %c0_0] : memref<16x32xf32, #tpu.memory_space<vmem>>, vector<16x32xf32>
    %c0_1 = arith.constant 0 : index
    %c0_2 = arith.constant 0 : index
    %1 = vector.load %arg1[%c0_1, %c0_2] : memref<16x32xf32, #tpu.memory_space<vmem>>, vector<16x32xf32>
    %2 = arith.mulf %0, %0 : vector<16x32xf32>
    %cst = arith.constant dense<0.000000e+00> : vector<16xf32>
    %3 = vector.multi_reduction <add>, %2, %cst [1] : vector<16x32xf32> to vector<16xf32>
    %4 = vector.shape_cast %3 : vector<16xf32> to vector<16x1xf32>
    %cst_3 = arith.constant 1.000000e-16 : f32
    %5 = vector.broadcast %cst_3 : f32 to vector<16x1xf32>
    %6 = arith.maximumf %4, %5 : vector<16x1xf32>
    %7 = math.rsqrt %6 : vector<16x1xf32>
    %8 = vector.broadcast %7 : vector<16x1xf32> to vector<16x32xf32>
    %9 = arith.mulf %0, %8 : vector<16x32xf32>
    %10 = arith.mulf %1, %1 : vector<16x32xf32>
    %cst_4 = arith.constant dense<0.000000e+00> : vector<16xf32>
    %11 = vector.multi_reduction <add>, %10, %cst_4 [1] : vector<16x32xf32> to vector<16xf32>
    %12 = vector.shape_cast %11 : vector<16xf32> to vector<16x1xf32>
    %cst_5 = arith.constant 1.000000e-16 : f32
    %13 = vector.broadcast %cst_5 : f32 to vector<16x1xf32>
    %14 = arith.maximumf %12, %13 : vector<16x1xf32>
    %15 = math.rsqrt %14 : vector<16x1xf32>
    %16 = vector.broadcast %15 : vector<16x1xf32> to vector<16x32xf32>
    %17 = arith.mulf %1, %16 : vector<16x32xf32>
    %cst_6 = arith.constant 1.41421354 : f32
    %18 = vector.broadcast %cst_6 : f32 to vector<16x32xf32>
    %19 = arith.mulf %9, %18 : vector<16x32xf32>
    %cst_7 = arith.constant 1.41421354 : f32
    %20 = vector.broadcast %cst_7 : f32 to vector<16x32xf32>
    %21 = arith.mulf %17, %20 : vector<16x32xf32>
    %c0_8 = arith.constant 0 : index
    %c0_9 = arith.constant 0 : index
    %22 = vector.load %arg2[%c0_8, %c0_9] : memref<32x32xf32, #tpu.memory_space<vmem>>, vector<16x32xf32>
    tpu.vector_store %arg2[%c0_8, %c0_9], %21 {strides = array<i32>} : memref<32x32xf32, #tpu.memory_space<vmem>>, vector<16x32xf32>,
    %c16 = arith.constant 16 : index
    %c0_10 = arith.constant 0 : index
    %23 = vector.load %arg2[%c16, %c0_10] : memref<32x32xf32, #tpu.memory_space<vmem>>, vector<16x32xf32>
    tpu.vector_store %arg2[%c16, %c0_10], %19 {strides = array<i32>} : memref<32x32xf32, #tpu.memory_space<vmem>>, vector<16x32xf32>,
    %24 = arith.mulf %19, %21 : vector<16x32xf32>
    %25 = vector.shape_cast %24 : vector<16x32xf32> to vector<1x16x32xf32>
    %cst_11 = arith.constant dense<0.000000e+00> : vector<1xf32>
    %26 = vector.multi_reduction <add>, %25, %cst_11 [1, 2] : vector<1x16x32xf32> to vector<1xf32>
    %27 = vector.shape_cast %26 : vector<1xf32> to vector<1x1x1xf32>
    %28 = vector.extract %27[0, 0, 0] : f32 from vector<1x1x1xf32>
    %cst_12 = arith.constant 2.000000e+00 : f32
    %29 = arith.mulf %cst_12, %28 : f32
    %c0_13 = arith.constant 0 : index
    %c0_14 = arith.constant 0 : index
    %30 = memref.load %arg3[%c0_13, %c0_14] : memref<1x1xf32, #tpu.memory_space<smem>>
    memref.store %29, %arg3[%c0_13, %c0_14] : memref<1x1xf32, #tpu.memory_space<smem>>
    return
  }
}

</mosaic_0001>

<llo_original>
// kernel: tpu_custom_call.1
$region0: #{tpu_custom_call.1}
  #allocation0 [shape = 'u32[]', space=smem, size = 0x4, offset = 0x4, fixed_abs, tag = 'smem constant byte address 0x4 - core index']
  #allocation1 [shape = 'u32[144,128]{1,0:T(1,128)}', space=vmem, size = 0x12000, scoped, tag = 'internal scratch']
  %s0 = inlined_call_operand.hbm [shape: f32[16,32], index: 0, kind: input, shape index: {}]
  %s1 = inlined_call_operand.hbm [shape: f32[16,32], index: 1, kind: input, shape index: {}]
  %s2 = inlined_call_operand.hbm [shape: f32[32,32], index: 2, kind: output, shape index: {0}]
  %s3 = inlined_call_operand.hbm [shape: f32[1,1], index: 3, kind: output, shape index: {1}]
  %4 = xla_tuple %s2, %s3
  %s5 = sld [smem:[#allocation0]]
  $region34: #{tpu_custom_call.1} parent=0
    _
  %s7 = ssub.s32 1, %s5
  %s8 = scalar_select 0, %s7, %s5
  $region1: #{tpu_custom_call.1} parent=0
    #allocation2 [shape = 'u8[8192]{0}', space=vmem, size = 0x2000, scoped, tag = 'input window, operand 0, single buffered']
    #allocation3 [shape = 's32[1]{0}', space=sflag, size = 0x4, scoped, tag = 'scoped memory for tpu_custom_call.1']
    #allocation4 [shape = 's32[1]{0}', space=sflag, size = 0x4, scoped, tag = 'scoped memory for tpu_custom_call.1']
    #allocation5 [shape = 's32[1]{0}', space=sflag, size = 0x4, scoped, tag = 'scoped memory for tpu_custom_call.1']
    #allocation6 [shape = 'u8[8192]{0}', space=vmem, size = 0x2000, scoped, tag = 'input window, operand 1, single buffered']
    #allocation7 [shape = 's32[1]{0}', space=sflag, size = 0x4, scoped, tag = 'scoped memory for tpu_custom_call.1']
    #allocation8 [shape = 'u8[16384]{0}', space=vmem, size = 0x4000, scoped, tag = 'output window, operand 0, single buffered']
    #allocation9 [shape = 'u8[512]{0}', space=smem, size = 0x200, scoped, tag = 'output window, operand 1, single buffered']
    %9 = vsyncpa [#allocation3], 0
    %10 = vsyncpa [#allocation7], 0
    %11 = vsyncpa [#allocation4], 0
    %12 = vsyncpa [#allocation5], 0
    // Predicated region
    $region2: #{tpu_custom_call.1} parent=1 // pred_check
      _
    $region3: #{tpu_custom_call.1} parent=1 // pred_check_branch
      %14 = sbr.rel (0) target = $region5
    $region4: #{tpu_custom_call.1} parent=1 // pred_region
      %s16 = ssub.s32 256, 256
      %17 = vsyncadd [#allocation3], %s16
      %s18 = sshll.u32 [#allocation2], 4
      %s19 = int_to_ptr.vmem [resolvable:$true] %s18
      %24 = dma.hbm_to_vmem [thread:$0]  %s0, 256, %s19, [#allocation3], 128, 128, 8
    $region5: #{tpu_custom_call.1} parent=1 // pred_fallthru
      _
    // Predicated region
    $region6: #{tpu_custom_call.1} parent=1 // pred_check
      _
    $region7: #{tpu_custom_call.1} parent=1 // pred_check_branch
      %26 = sbr.rel (0) target = $region9
    $region8: #{tpu_custom_call.1} parent=1 // pred_region
      %s28 = ssub.s32 256, 256
      %29 = vsyncadd [#allocation7], %s28
      %s30 = sshll.u32 [#allocation6], 4
      %s31 = int_to_ptr.vmem [resolvable:$true] %s30
      %36 = dma.hbm_to_vmem [thread:$0]  %s1, 256, %s31, [#allocation7], 128, 128, 8
    $region9: #{tpu_custom_call.1} parent=1 // pred_fallthru
      _
    // Predicated region
    $region10: #{tpu_custom_call.1} parent=1 // pred_check
      _
    $region11: #{tpu_custom_call.1} parent=1 // pred_check_branch
      %38 = sbr.rel (0) target = $region13
    $region12: #{tpu_custom_call.1} parent=1 // pred_region
      %39 = dma.done [#allocation3], 256
    $region13: #{tpu_custom_call.1} parent=1 // pred_fallthru
      _
    // Predicated region
    $region14: #{tpu_custom_call.1} parent=1 // pred_check
      _
    $region15: #{tpu_custom_call.1} parent=1 // pred_check_branch
      %41 = sbr.rel (0) target = $region17
    $region16: #{tpu_custom_call.1} parent=1 // pred_region
      %42 = dma.done [#allocation7], 256
    $region17: #{tpu_custom_call.1} parent=1 // pred_fallthru
      _
    %v43 = vld [vmem:[#allocation2] sm:$0xff]
    %v44 = vld [vmem:[#allocation2 + $0x8] sm:$0xff]
    %v45 = vld [vmem:[#allocation6] sm:$0xff]
    %v46 = vld [vmem:[#allocation6 + $0x8] sm:$0xff]
    %v47 = vmul.f32 %v43, %v43
    %v48 = vmul.f32 %v44, %v44
    %vm49 = vcmask 261120
    %v50 = vsel %vm49, %v47, 0.0
    %51 = vadd.xlane.f32.xlu0 %v50
    %v52 = vpop.xlane.xlu0 %51
    %v53 = vsel %vm49, %v48, 0.0
    %54 = vadd.xlane.f32.xlu0 %v53
    %v55 = vpop.xlane.xlu0 %54
    %v56 = vmax.f32 %v52, 1e-16
    %v57 = vmax.f32 %v55, 1e-16
    %v58 = vrsqrt.pop %v56
    %v59 = vrsqrt.pop %v57
    %v60 = vmul.f32 %v43, %v58
    %v61 = vmul.f32 %v44, %v59
    %v62 = vmul.f32 %v45, %v45
    %v63 = vmul.f32 %v46, %v46
    %v64 = vsel %vm49, %v62, 0.0
    %65 = vadd.xlane.f32.xlu0 %v64
    %v66 = vpop.xlane.xlu0 %65
    %v67 = vsel %vm49, %v63, 0.0
    %68 = vadd.xlane.f32.xlu0 %v67
    %v69 = vpop.xlane.xlu0 %68
    %v70 = vmax.f32 %v66, 1e-16
    %v71 = vmax.f32 %v69, 1e-16
    %v72 = vrsqrt.pop %v70
    %v73 = vrsqrt.pop %v71
    %v74 = vmul.f32 %v45, %v72
    %v75 = vmul.f32 %v46, %v73
    %v76 = vmul.f32 %v60, 1.4142135
    %v77 = vmul.f32 %v61, 1.4142135
    %v78 = vmul.f32 %v74, 1.4142135
    %v79 = vmul.f32 %v75, 1.4142135
    %80 = vst.msk [vmem:[#allocation8] sm:$0xff] %vm49, %v78
    %81 = vst.msk [vmem:[#allocation8 + $0x8] sm:$0xff] %vm49, %v79
    %82 = vst.msk [vmem:[#allocation8 + $0x10] sm:$0xff] %vm49, %v76
    %83 = vst.msk [vmem:[#allocation8 + $0x18] sm:$0xff] %vm49, %v77
    %v84 = vmul.f32 %v76, %v78
    %v85 = vmul.f32 %v77, %v79
    %v86 = vsel %vm49, %v84, 0.0
    %v87 = vsel %vm49, %v85, 0.0
    %v88 = vadd.f32 %v86, %v87
    %89 = vadd.xlane.f32.xlu0 %v88
    %v90 = vpop.xlane.xlu0 %89
    %v91 = vrot.slane %v90, 4
    %v92 = vadd.f32 %v90, %v91
    %v93 = vrot.slane %v92, 2
    %v94 = vadd.f32 %v92, %v93
    %v95 = vrot.slane %v94, 1
    %v96 = vadd.f32 %v94, %v95
    %s97 = vtos %v96
    %s98 = smul.f32 %s97, 2.0
    %s99 = scalar_lea.smem [#allocation9], 0
    %100 = sst [smem:[%s99]] %s98
    // Predicated region
    $region18: #{tpu_custom_call.1} parent=1 // pred_check
      _
    $region19: #{tpu_custom_call.1} parent=1 // pred_check_branch
      %102 = sbr.rel (0) target = $region21
    $region20: #{tpu_custom_call.1} parent=1 // pred_region
      %s104 = ssub.s32 512, 512
      %105 = vsyncadd [#allocation4], %s104
      %s106 = sshll.u32 [#allocation8], 4
      %s107 = int_to_ptr.vmem [resolvable:$true] %s106
      %112 = dma.vmem_to_hbm [thread:$0]  %s107, 512, %s2, [#allocation4], 128, 128, 8
    $region21: #{tpu_custom_call.1} parent=1 // pred_fallthru
      _
    // Predicated region
    $region22: #{tpu_custom_call.1} parent=1 // pred_check
      _
    $region23: #{tpu_custom_call.1} parent=1 // pred_check_branch
      %114 = sbr.rel (0) target = $region25
    $region24: #{tpu_custom_call.1} parent=1 // pred_region
      %s116 = ssub.s32 16, 16
      %117 = vsyncadd [#allocation5], %s116
      %120 = dma.smem_to_hbm [#allocation9], 16, %s3, [#allocation5]
    $region25: #{tpu_custom_call.1} parent=1 // pred_fallthru
      _
    // Predicated region
    $region26: #{tpu_custom_call.1} parent=1 // pred_check
      _
    $region27: #{tpu_custom_call.1} parent=1 // pred_check_branch
      %122 = sbr.rel (0) target = $region29
    $region28: #{tpu_custom_call.1} parent=1 // pred_region
      %123 = dma.done [#allocation4], 512
    $region29: #{tpu_custom_call.1} parent=1 // pred_fallthru
      _
    // Predicated region
    $region30: #{tpu_custom_call.1} parent=1 // pred_check
      _
    $region31: #{tpu_custom_call.1} parent=1 // pred_check_branch
      %125 = sbr.rel (0) target = $region33
    $region32: #{tpu_custom_call.1} parent=1 // pred_region
      %126 = dma.done [#allocation5], 16
    $region33: #{tpu_custom_call.1} parent=1 // pred_fallthru
      _
    %127 = sfence
    %128 = vsyncpa [#allocation3], 1
    %129 = vsyncpa [#allocation7], 1
    %130 = vsyncpa [#allocation4], 1
    %131 = vsyncpa [#allocation5], 1

</llo_original>
